<compile_context>
chip_gen: v6e
topology: v6e:2x2x1
jax: 0.10.0
libtpu: 0.0.40
codegen_flags: <defaults>
</compile_context>

<pallas_src>
import functools

import jax
import jax.numpy as jnp
from jax.experimental import pallas as pl
from jax.experimental.pallas import tpu as pltpu


def _dist_linear_kernel(x_scale_ref, x_ref, w_ref, o_ref, w_inv_ref, *, eps):
    # Grid = (j: out-feature tiles [outer], i: batch tiles [inner]).
    i = pl.program_id(1)

    # The W tile only changes when j changes, i.e. at the start of the inner
    # batch loop -> compute its column inverse-norms once per N tile.
    @pl.when(i == 0)
    def _():
        w = w_ref[...].astype(jnp.float32)          # f32 accumulation for norms
        ssq = jnp.sum(w * w, axis=0, keepdims=True)  # (1, tn)
        w_inv_ref[...] = jax.lax.rsqrt(ssq + eps)

    # Raw matmul on native-dtype operands (bf16-friendly), f32 accumulation.
    cos = jnp.dot(x_ref[...], w_ref[...],
                  preferred_element_type=jnp.float32)          # (tm, tn)

    # Scale the small (tm, tn) result instead of the big operands.
    scores = cos * x_scale_ref[...].astype(jnp.float32) * w_inv_ref[...]
    o_ref[...] = scores.astype(o_ref.dtype)


def _round_up(a, m):
    return (a + m - 1) // m * m


def dist_linear(x, weight, scale_factor=10, *, tm_max=256, tn_max=512, eps=1e-12):
    """x: (B, size_in), weight: (size_in, size_out) -> (B, size_out)."""
    b, size_in = x.shape
    size_in_w, size_out = weight.shape
    assert size_in == size_in_w
    out_dtype = x.dtype

    # Precompute scale_factor / ||x_row|| in f32 (tiny vs. the W stream).
    x_f32 = x.astype(jnp.float32)
    x_scale = float(scale_factor) * jax.lax.rsqrt(
        jnp.sum(x_f32 * x_f32, axis=-1, keepdims=True) + eps)   # (B, 1) f32

    # Tile sizes: tn a multiple of 128 (lane-dense output), tm a multiple of 8.
    tn = min(tn_max, _round_up(size_out, 128))
    tm = min(tm_max, _round_up(b, 8))
    n_pad = _round_up(size_out, tn)
    b_pad = _round_up(b, tm)

    if n_pad != size_out:
        weight = jnp.pad(weight, ((0, 0), (0, n_pad - size_out)))
    if b_pad != b:
        x = jnp.pad(x, ((0, b_pad - b), (0, 0)))
        x_scale = jnp.pad(x_scale, ((0, b_pad - b), (0, 0)))

    # j (out-feature tiles) outer, i (batch tiles) inner -> W tile resident
    # across batch tiles (its index_map ignores i), streamed from HBM once.
    grid = (n_pad // tn, b_pad // tm)

    kernel = functools.partial(_dist_linear_kernel, eps=float(eps))

    out = pl.pallas_call(
        kernel,
        out_shape=jax.ShapeDtypeStruct((b_pad, n_pad), out_dtype),
        grid_spec=pltpu.PrefetchScalarGridSpec(
            num_scalar_prefetch=0,
            grid=grid,
            in_specs=[
                pl.BlockSpec((tm, 1), lambda j, i: (i, 0)),        # x_scale
                pl.BlockSpec((tm, size_in), lambda j, i: (i, 0)),  # x
                pl.BlockSpec((size_in, tn), lambda j, i: (0, j)),  # W (resident over i)
            ],
            out_specs=pl.BlockSpec((tm, tn), lambda j, i: (i, j)),
            scratch_shapes=[pltpu.VMEM((1, tn), jnp.float32)],     # 1/||w_col||
        ),
        compiler_params=pltpu.CompilerParams(
            # N axis independent -> parallel (megacore on v7x, no-op v5e/v6e);
            # batch axis must be sequential (w_inv scratch reused across i).
            dimension_semantics=("parallel", "arbitrary"),
            # Explicit budget: safe on v5e (16 MiB default), v6e/v7x (32 MiB).
            vmem_limit_bytes=32 * 1024 * 1024,
        ),
    )(x_scale, x, weight)

    return out[:b, :size_out]


def _reference(x, weight, scale_factor=10):
    xn = x / jnp.linalg.norm(x, axis=-1, keepdims=True)
    wn = weight / jnp.linalg.norm(weight, axis=0, keepdims=True)
    return scale_factor * (xn @ wn)


if __name__ == "__main__":
    key = jax.random.PRNGKey(0)
    k_x, k_w = jax.random.split(key)

    batch = 8
    size_in = 32
    size_out = 16
    scale_factor = 10

    # Module does torch.randn((size_in, size_out)) for its weight.
    weight = jax.random.normal(k_w, (size_in, size_out), dtype=jnp.float32)
    x = jax.random.normal(k_x, (batch, size_in), dtype=jnp.float32)

    out = dist_linear(x, weight, scale_factor)
    out = jax.block_until_ready(out)

    ref = _reference(x, weight, scale_factor)
    assert out.shape == (batch, size_out)
    assert jnp.allclose(out, ref, atol=1e-4, rtol=1e-4), "mismatch vs reference"

    print("KERNEL_OK")
</pallas_src>

<mosaic_0001>
module attributes {stable_mosaic.version = 11 : i64} {
  func.func @_dist_linear_kernel(%arg0: i32, %arg1: i32, %arg2: memref<8x1xf32, #tpu.memory_space<vmem>>, %arg3: memref<8x32xf32, #tpu.memory_space<vmem>>, %arg4: memref<32x128xf32, #tpu.memory_space<vmem>>, %arg5: memref<8x128xf32, #tpu.memory_space<vmem>>, %arg6: memref<1x128xf32, #tpu.memory_space<vmem>>) attributes {dimension_semantics = [#tpu.dimension_semantics<parallel>, #tpu.dimension_semantics<arbitrary>], iteration_bounds = array<i64: 1, 1>, scalar_prefetch = 0 : i64, scratch_operands = 1 : i64, tpu.core_type = #tpu.core_type<tc>, window_params = [{transform_indices = @transform_0, window_bounds = array<i64: 8, 1>}, {transform_indices = @transform_1, window_bounds = array<i64: 8, 32>}, {transform_indices = @transform_2, window_bounds = array<i64: 32, 128>}, {transform_indices = @transform_3, window_bounds = array<i64: 8, 128>}]} {
    %c0_i32 = arith.constant 0 : i32
    %0 = arith.cmpi eq, %arg1, %c0_i32 : i32
    %1 = arith.extui %0 : i1 to i32
    %c0_i32_0 = arith.constant 0 : i32
    %2 = arith.cmpi ne, %1, %c0_i32_0 : i32
    scf.if %2 {
      %c0_10 = arith.constant 0 : index
      %c0_11 = arith.constant 0 : index
      %13 = vector.load %arg4[%c0_10, %c0_11] : memref<32x128xf32, #tpu.memory_space<vmem>>, vector<32x128xf32>
      %14 = arith.mulf %13, %13 : vector<32x128xf32>
      %cst_12 = arith.constant dense<0.000000e+00> : vector<128xf32>
      %15 = vector.multi_reduction <add>, %14, %cst_12 [0] : vector<32x128xf32> to vector<128xf32>
      %16 = vector.shape_cast %15 : vector<128xf32> to vector<1x128xf32>
      %cst_13 = arith.constant 9.99999996E-13 : f32
      %17 = vector.broadcast %cst_13 : f32 to vector<1x128xf32>
      %18 = arith.addf %16, %17 : vector<1x128xf32>
      %19 = math.rsqrt %18 : vector<1x128xf32>
      %c0_14 = arith.constant 0 : index
      %c0_15 = arith.constant 0 : index
      %20 = vector.load %arg6[%c0_14, %c0_15] : memref<1x128xf32, #tpu.memory_space<vmem>>, vector<1x128xf32>
      tpu.vector_store %arg6[%c0_14, %c0_15], %19 {strides = array<i32>} : memref<1x128xf32, #tpu.memory_space<vmem>>, vector<1x128xf32>,
    } else {
    }
    %c0 = arith.constant 0 : index
    %c0_1 = arith.constant 0 : index
    %3 = vector.load %arg3[%c0, %c0_1] : memref<8x32xf32, #tpu.memory_space<vmem>>, vector<8x32xf32>
    %c0_2 = arith.constant 0 : index
    %c0_3 = arith.constant 0 : index
    %4 = vector.load %arg4[%c0_2, %c0_3] : memref<32x128xf32, #tpu.memory_space<vmem>>, vector<32x128xf32>
    %cst = arith.constant dense<0.000000e+00> : vector<8x128xf32>
    %5 = tpu.matmul %3, %4, %cst {dimension_numbers = #tpu.dot_dimension_numbers<[1], [0], [0], [1], [0, 0, 1, 1], [], []>} : vector<8x32xf32>, vector<32x128xf32>, vector<8x128xf32> -> vector<8x128xf32>
    %c0_4 = arith.constant 0 : index
    %c0_5 = arith.constant 0 : index
    %6 = vector.load %arg2[%c0_4, %c0_5] : memref<8x1xf32, #tpu.memory_space<vmem>>, vector<8x1xf32>
    %7 = vector.broadcast %6 : vector<8x1xf32> to vector<8x128xf32>
    %8 = arith.mulf %5, %7 : vector<8x128xf32>
    %c0_6 = arith.constant 0 : index
    %c0_7 = arith.constant 0 : index
    %9 = vector.load %arg6[%c0_6, %c0_7] : memref<1x128xf32, #tpu.memory_space<vmem>>, vector<1x128xf32>
    %10 = vector.broadcast %9 : vector<1x128xf32> to vector<8x128xf32>
    %11 = arith.mulf %8, %10 : vector<8x128xf32>
    %c0_8 = arith.constant 0 : index
    %c0_9 = arith.constant 0 : index
    %12 = vector.load %arg5[%c0_8, %c0_9] : memref<8x128xf32, #tpu.memory_space<vmem>>, vector<8x128xf32>
    tpu.vector_store %arg5[%c0_8, %c0_9], %11 {strides = array<i32>} : memref<8x128xf32, #tpu.memory_space<vmem>>, vector<8x128xf32>,
    return
  }
  func.func @transform_0(%arg0: i32, %arg1: i32) -> (i32, i32) {
    %c0_i32 = arith.constant 0 : i32
    %c0_i32_0 = arith.constant 0 : i32
    return %arg1, %c0_i32 : i32, i32
  }
  func.func @transform_1(%arg0: i32, %arg1: i32) -> (i32, i32) {
    %c0_i32 = arith.constant 0 : i32
    %c0_i32_0 = arith.constant 0 : i32
    return %arg1, %c0_i32 : i32, i32
  }
  func.func @transform_2(%arg0: i32, %arg1: i32) -> (i32, i32) {
    %c0_i32 = arith.constant 0 : i32
    %c0_i32_0 = arith.constant 0 : i32
    return %c0_i32, %arg0 : i32, i32
  }
  func.func @transform_3(%arg0: i32, %arg1: i32) -> (i32, i32) {
    %c0_i32 = arith.constant 0 : i32
    return %arg1, %arg0 : i32, i32
  }
}

</mosaic_0001>

<llo_original>
// kernel: tpu_custom_call.1
$region0: #{tpu_custom_call.1}
  #allocation0 [shape = 'u32[]', space=smem, size = 0x4, offset = 0x4, fixed_abs, tag = 'smem constant byte address 0x4 - core index']
  #allocation1 [shape = 'u32[144,128]{1,0:T(1,128)}', space=vmem, size = 0x12000, scoped, tag = 'internal scratch']
  #allocation2 [shape = 'f32[1,128]{1,0:T(1,128)}', space=vmem, size = 0x200, scoped, tag = 'scratch operand']
  %s0 = inlined_call_operand.vmem [shape: f32[8,1], index: 0, kind: input, shape index: {}]
  %s1 = inlined_call_operand.vmem [shape: f32[8,32], index: 1, kind: input, shape index: {}]
  %s2 = inlined_call_operand.hbm [shape: f32[32,128], index: 2, kind: input, shape index: {}]
  %s3 = inlined_call_operand.hbm [shape: f32[8,128], index: 3, kind: output, shape index: {}]
  %s4 = sld [smem:[#allocation0]]
  $region30: #{tpu_custom_call.1} parent=0
    _
  %s6 = ssub.s32 1, %s4
  %s7 = scalar_select 0, %s6, %s4
  $region1: #{tpu_custom_call.1} parent=0
    #allocation3 [shape = 'u8[16384]{0}', space=vmem, size = 0x4000, scoped, tag = 'input window, operand 2, single buffered']
    #allocation4 [shape = 's32[1]{0}', space=sflag, size = 0x4, scoped, tag = 'scoped memory for tpu_custom_call.1']
    #allocation5 [shape = 's32[1]{0}', space=sflag, size = 0x4, scoped, tag = 'scoped memory for tpu_custom_call.1']
    #allocation6 [shape = 'u8[4096]{0}', space=vmem, size = 0x1000, scoped, tag = 'output window, operand 0, single buffered']
    %8 = vsyncpa [#allocation4], 0
    %9 = vsyncpa [#allocation5], 0
    // Predicated region
    $region2: #{tpu_custom_call.1} parent=1 // pred_check
      _
    $region3: #{tpu_custom_call.1} parent=1 // pred_check_branch
      %11 = sbr.rel (0) target = $region5
    $region4: #{tpu_custom_call.1} parent=1 // pred_region
      _
    $region5: #{tpu_custom_call.1} parent=1 // pred_fallthru
      _
    // Predicated region
    $region6: #{tpu_custom_call.1} parent=1 // pred_check
      _
    $region7: #{tpu_custom_call.1} parent=1 // pred_check_branch
      %13 = sbr.rel (0) target = $region9
    $region8: #{tpu_custom_call.1} parent=1 // pred_region
      _
    $region9: #{tpu_custom_call.1} parent=1 // pred_fallthru
      _
    // Predicated region
    $region10: #{tpu_custom_call.1} parent=1 // pred_check
      _
    $region11: #{tpu_custom_call.1} parent=1 // pred_check_branch
      %15 = sbr.rel (0) target = $region13
    $region12: #{tpu_custom_call.1} parent=1 // pred_region
      %s17 = ssub.s32 512, 512
      %18 = vsyncadd [#allocation4], %s17
      %s19 = sshll.u32 [#allocation3], 4
      %s20 = int_to_ptr.vmem [resolvable:$true] %s19
      %25 = dma.hbm_to_vmem [thread:$0]  %s2, 512, %s20, [#allocation4], 128, 128, 8
    $region13: #{tpu_custom_call.1} parent=1 // pred_fallthru
      _
    // Predicated region
    $region14: #{tpu_custom_call.1} parent=1 // pred_check
      _
    $region15: #{tpu_custom_call.1} parent=1 // pred_check_branch
      %27 = sbr.rel (0) target = $region17
    $region16: #{tpu_custom_call.1} parent=1 // pred_region
      %28 = dma.done [#allocation4], 512
    $region17: #{tpu_custom_call.1} parent=1 // pred_fallthru
      _
    %p29 = scmp.eq.s32.totalorder 0, 0
    // Predicated region
    $region18: #{tpu_custom_call.1} parent=1 // pred_check
      %p30 = pneg %p29
    $region19: #{tpu_custom_call.1} parent=1 // pred_check_branch
      %32 = sbr.rel (%p30) target = $region21
    $region20: #{tpu_custom_call.1} parent=1 // pred_region
      %v33 = vld [vmem:[#allocation3] sm:$0xff]
      %v34 = vld [vmem:[#allocation3 + $0x8] sm:$0xff]
      %v35 = vld [vmem:[#allocation3 + $0x10] sm:$0xff]
      %v36 = vld [vmem:[#allocation3 + $0x18] sm:$0xff]
      %v37 = vmul.f32 %v33, %v33
      %v38 = vmul.f32 %v34, %v34
      %v39 = vmul.f32 %v35, %v35
      %v40 = vmul.f32 %v36, %v36
      %v41 = vadd.f32 %v37, %v38
      %v42 = vadd.f32 %v41, %v39
      %v43 = vadd.f32 %v42, %v40
      %v44 = vrot.slane %v43, 4
      %v45 = vadd.f32 %v43, %v44
      %v46 = vrot.slane %v45, 2
      %v47 = vadd.f32 %v45, %v46
      %v48 = vrot.slane %v47, 1
      %v49 = vadd.f32 %v47, %v48
      %v50 = vadd.f32 %v49, 1e-12
      %v51 = vrsqrt.pop %v50
      %52 = vst [vmem:[#allocation2] sm:$0x1] %v51
    $region21: #{tpu_custom_call.1} parent=1 // pred_fallthru
      _
    %v53 = vld [vmem:[%s1] sm:$0xff]
    %v54 = vld [vmem:[#allocation3] sm:$0xff]
    %v55 = vld [vmem:[#allocation3 + $0x8] sm:$0xff]
    %v56 = vld [vmem:[#allocation3 + $0x10] sm:$0xff]
    %v57 = vld [vmem:[#allocation3 + $0x18] sm:$0xff]
    %vm58 = vcmask 261120
    %v60 = vsel %vm58, %v53, 0
    %62 = vmatprep.subr.mxu0 0.0
    %63 = vmatpush1.msra.mxu0 0.0
    %64 = vmatprep.subr.mxu0 0.0
    %65 = vmatpush1.msra.mxu0 0.0
    %66 = vmatprep.subr.mxu0 0.0
    %67 = vmatpush1.msra.mxu0 0.0
    %68 = vmatprep.subr.mxu0 0.0
    %69 = vmatpush1.msra.mxu0 0.0
    %70 = vmatprep.subr.mxu0 0.0
    %71 = vmatpush1.msra.mxu0 0.0
    %72 = vmatprep.subr.mxu0 0.0
    %73 = vmatpush1.msra.mxu0 0.0
    %74 = vmatprep.subr.mxu0 0.0
    %75 = vmatpush1.msra.mxu0 0.0
    %76 = vmatprep.subr.mxu0 0.0
    %77 = vmatpush1.msra.mxu0 0.0
    %78 = vmatprep.subr.mxu0 0.0
    %79 = vmatpush1.msra.mxu0 0.0
    %80 = vmatprep.subr.mxu0 0.0
    %81 = vmatpush1.msra.mxu0 0.0
    %82 = vmatprep.subr.mxu0 0.0
    %83 = vmatpush1.msra.mxu0 0.0
    %84 = vmatprep.subr.mxu0 0.0
    %85 = vmatpush1.msra.mxu0 0.0
    %86 = vmatprep.subr.mxu0 0.0
    %87 = vmatpush1.msra.mxu0 %v57
    %88 = vmatprep.subr.mxu0 0.0
    %89 = vmatpush1.msra.mxu0 %v56
    %90 = vmatprep.subr.mxu0 0.0
    %91 = vmatpush1.msra.mxu0 %v55
    %92 = vmatprep.subr.mxu0 0.0
    %93 = vmatpush1.msra.mxu0 %v54
    %94 = vmatprep.subr.mxu0 0.0
    %95 = vmatpush2.msra.mxu0 0.0
    %96 = vmatprep.subr.mxu0 0.0
    %97 = vmatpush2.msra.mxu0 0.0
    %98 = vmatprep.subr.mxu0 0.0
    %99 = vmatpush2.msra.mxu0 0.0
    %100 = vmatprep.subr.mxu0 0.0
    %101 = vmatpush2.msra.mxu0 0.0
    %102 = vmatprep.subr.mxu0 0.0
    %103 = vmatpush2.msra.mxu0 0.0
    %104 = vmatprep.subr.mxu0 0.0
    %105 = vmatpush2.msra.mxu0 0.0
    %106 = vmatprep.subr.mxu0 0.0
    %107 = vmatpush2.msra.mxu0 0.0
    %108 = vmatprep.subr.mxu0 0.0
    %109 = vmatpush2.msra.mxu0 0.0
    %110 = vmatprep.subr.mxu0 0.0
    %111 = vmatpush2.msra.mxu0 0.0
    %112 = vmatprep.subr.mxu0 0.0
    %113 = vmatpush2.msra.mxu0 0.0
    %114 = vmatprep.subr.mxu0 0.0
    %115 = vmatpush2.msra.mxu0 0.0
    %116 = vmatprep.subr.mxu0 0.0
    %117 = vmatpush2.msra.mxu0 0.0
    %118 = vmatprep.subr.mxu0 0.0
    %119 = vmatpush2.msra.mxu0 0.0
    %120 = vmatprep.subr.mxu0 0.0
    %121 = vmatpush2.msra.mxu0 0.0
    %122 = vmatprep.subr.mxu0 0.0
    %123 = vmatpush2.msra.mxu0 0.0
    %124 = vmatprep.subr.mxu0 0.0
    %125 = vmatpush2.msra.mxu0 0.0
    %126 = vmatprep.mubr.f32.mxu0 0.0
    %127 = vmatmul.mubr.f32.gmra.mxu0 %v60
    %v128 = vpop.f32.mrf.mxu0
    %v129 = vadd.f32 0.0, %v128
    %v130 = vpop.f32.mrf.mxu0
    %131 = vdwg.mxu0
    %v132 = vld [vmem:[%s0] sm:$0xff]
    %134 = vset.pattern.permute.xlu0 0
    %135 = vperm.xlu0 %134, %v132
    %v136 = vpop.permute.xlu0 %135
    %v138 = vmul.f32 %v129, %v136
    %v139 = vld [vmem:[#allocation2] sm:$0x1]
    %v141 = vlaneseq
    %v142 = vshrl.u32 %v141, 7
    %v143 = vsub.s32 0, %v142
    %v144 = vrot.slane %v139, %v143
    %v146 = vmul.f32 %v138, %v144
    %147 = vst [vmem:[#allocation6] sm:$0xff] %v146
    // Predicated region
    $region22: #{tpu_custom_call.1} parent=1 // pred_check
      _
    $region23: #{tpu_custom_call.1} parent=1 // pred_check_branch
      %149 = sbr.rel (0) target = $region25
    $region24: #{tpu_custom_call.1} parent=1 // pred_region
      %s151 = ssub.s32 128, 128
      %152 = vsyncadd [#allocation5], %s151
      %s154 = sshll.u32 [#allocation6], 4
      %s155 = int_to_ptr.vmem [resolvable:$true] %s154
      %157 = dma.vmem_to_hbm [thread:$0]  %s155, 128, %s3, [#allocation5]
    $region25: #{tpu_custom_call.1} parent=1 // pred_fallthru
      _
    // Predicated region
    $region26: #{tpu_custom_call.1} parent=1 // pred_check
      _
    $region27: #{tpu_custom_call.1} parent=1 // pred_check_branch
      %159 = sbr.rel (0) target = $region29
    $region28: #{tpu_custom_call.1} parent=1 // pred_region
      %160 = dma.done [#allocation5], 128
    $region29: #{tpu_custom_call.1} parent=1 // pred_fallthru
      _
    %161 = vsyncpa [#allocation4], 1
    %162 = vsyncpa [#allocation5], 1

</llo_original>
